<compile_context>
chip_gen: v7x
topology: tpu7x:2x2x1
jax: 0.10.0
libtpu: 0.0.40
codegen_flags: <defaults>
</compile_context>

<pallas_src>
import jax
import jax.numpy as jnp
from jax.experimental import pallas as pl
from jax.experimental.pallas import tpu as pltpu

BN_EPS = 1e-5


def _domain_classifier_kernel(h_ref, *refs):
    """4 x [Linear(no bias) -> BatchNorm1d(train) -> ReLU] -> Linear(F,1).

    refs layout:
      4 blocks of (wT_bf16 (F,F), gamma (1,F), beta (1,F))  -> 12 refs
      final (w5 (1,F) f32, b5 (1,1) f32)                    ->  2 refs
      output (B,1) f32                                      ->  1 ref
    """
    o_ref = refs[-1]
    p = refs[:-1]

    x = h_ref[...]  # (B, F) f32 -- input is already f32, no extra cast

    for blk in range(4):
        wT = p[3 * blk + 0][...]      # (F, F) bf16, pre-transposed (in, out)
        gamma = p[3 * blk + 1][...]   # (1, F) f32
        beta = p[3 * blk + 2][...]    # (1, F) f32

        # Linear, bias dropped (cancels under training-mode BatchNorm).
        # bf16 operands on the MXU, f32 accumulation.
        z = jnp.dot(x.astype(jnp.bfloat16), wT,
                    preferred_element_type=jnp.float32)   # (B, F) f32

        # BatchNorm1d (training: biased variance over the batch axis), folded
        # so the (B,F)-wide epilogue is just mul + add + max (ReLU fused in).
        mu = jnp.mean(z, axis=0, keepdims=True)           # (1, F)
        c = z - mu                                        # (B, F)
        var = jnp.mean(c * c, axis=0, keepdims=True)      # (1, F)
        scale = gamma * jax.lax.rsqrt(var + BN_EPS)       # (1, F)  (EUP rsqrt)
        x = jnp.maximum(c * scale + beta, 0.0)            # (B, F)

    # Final Linear(F, 1): an N=1 MXU matmul wastes the array width; a VPU
    # multiply + lane reduction is cheaper and keeps w5 lane-dense as (1, F).
    w5 = p[12][...]                                       # (1, F) f32
    b5 = p[13][...]                                       # (1, 1) f32
    y = jnp.sum(x * w5, axis=-1, keepdims=True) + b5      # (B, 1)

    o_ref[...] = y.astype(o_ref.dtype)


def prepare_kernel_params(params):
    """params: 4 tuples (w(out,in), b(out,), gamma(F,), beta(F,)) + (w5(1,F), b5(1,)).

    Returns the flat kernel operand list: weights pre-transposed and cast to
    bf16, hidden-layer biases dropped (they cancel under training-mode BN).
    """
    kernel_args = []
    for (w, b, gamma, beta) in params[:-1]:
        del b  # redundant: training-mode BatchNorm removes the batch mean
        kernel_args.append(jnp.asarray(w).T.astype(jnp.bfloat16))            # (in, out)
        kernel_args.append(jnp.asarray(gamma).reshape(1, -1).astype(jnp.float32))
        kernel_args.append(jnp.asarray(beta).reshape(1, -1).astype(jnp.float32))
    w5, b5 = params[-1]
    kernel_args.append(jnp.asarray(w5).reshape(1, -1).astype(jnp.float32))    # (1, F)
    kernel_args.append(jnp.asarray(b5).reshape(1, 1).astype(jnp.float32))     # (1, 1)
    return kernel_args


def domain_classifier_forward(h, kernel_args):
    """h: (B, F) float32.  kernel_args: output of prepare_kernel_params."""
    B, F = h.shape
    n_in = 1 + len(kernel_args)
    vmem_spec = pl.BlockSpec(memory_space=pltpu.MemorySpace.VMEM)

    # Everything is resident in VMEM: 4 bf16 FxF weights + a handful of
    # (B,F)/(1,F) f32 working blocks.  Give Mosaic an explicit budget.
    weight_bytes = 4 * F * F * 2                 # bf16 weights
    act_bytes = 8 * B * F * 4                    # f32 activation working set
    small_bytes = 16 * F * 4 + 4 * B             # gamma/beta/w5/output rows
    vmem_limit = int(min(weight_bytes + act_bytes + small_bytes + (2 << 20),
                         64 * 1024 * 1024))
    # TODO(synk): for F >= ~1536 or B >> 128, tile the matmuls (K/N) and the
    # batch (grid + accumulator-style BN stats, 'parallel' batch axis so v7x's
    # two TensorCores both work) instead of keeping everything resident.

    cost = pl.CostEstimate(
        flops=int(2 * B * F * F * 4 + 2 * B * F),
        transcendentals=int(4 * F),
        bytes_accessed=int(B * F * 4 + weight_bytes + 16 * F * 4 + B * 4),
    )

    return pl.pallas_call(
        _domain_classifier_kernel,
        out_shape=jax.ShapeDtypeStruct((B, 1), jnp.float32),
        in_specs=[vmem_spec] * n_in,
        out_specs=vmem_spec,
        compiler_params=pltpu.CompilerParams(vmem_limit_bytes=vmem_limit),
        cost_estimate=cost,
    )(h, *kernel_args)


def init_params(key, F):
    """Deterministic init mimicking PyTorch defaults (uniform +/- 1/sqrt(fan_in))."""
    params = []
    keys = jax.random.split(key, 10)
    k_it = iter(keys)

    bound = 1.0 / jnp.sqrt(jnp.float32(F))
    for _ in range(4):
        w = jax.random.uniform(next(k_it), (F, F), jnp.float32, -bound, bound)
        b = jax.random.uniform(next(k_it), (F,), jnp.float32, -bound, bound)
        gamma = jnp.ones((F,), jnp.float32)     # BatchNorm1d weight
        beta = jnp.zeros((F,), jnp.float32)     # BatchNorm1d bias
        params.append((w, b, gamma, beta))

    w5 = jax.random.uniform(next(k_it), (1, F), jnp.float32, -bound, bound)
    b5 = jax.random.uniform(next(k_it), (1,), jnp.float32, -bound, bound)
    params.append((w5, b5))
    return params


if __name__ == "__main__":
    B = 8          # batch (multiple of 8 sublanes)
    F = 128        # input_features_number (multiple of 128 lanes)

    key = jax.random.PRNGKey(0)
    k_x, k_p = jax.random.split(key)
    h = jax.random.normal(k_x, (B, F), jnp.float32)
    params = init_params(k_p, F)
    kernel_args = prepare_kernel_params(params)   # one-time transpose + bf16 cast

    fwd = jax.jit(domain_classifier_forward)
    y = jax.block_until_ready(fwd(h, kernel_args))

    assert y.shape == (B, 1) and y.dtype == jnp.float32
    assert bool(jnp.all(jnp.isfinite(y)))
    print("KERNEL_OK")
</pallas_src>

<mosaic_0001>
module attributes {stable_mosaic.version = 11 : i64} {
  func.func @_domain_classifier_kernel(%arg0: memref<8x128xf32, #tpu.memory_space<vmem>>, %arg1: memref<128x128xbf16, #tpu.memory_space<vmem>>, %arg2: memref<1x128xf32, #tpu.memory_space<vmem>>, %arg3: memref<1x128xf32, #tpu.memory_space<vmem>>, %arg4: memref<128x128xbf16, #tpu.memory_space<vmem>>, %arg5: memref<1x128xf32, #tpu.memory_space<vmem>>, %arg6: memref<1x128xf32, #tpu.memory_space<vmem>>, %arg7: memref<128x128xbf16, #tpu.memory_space<vmem>>, %arg8: memref<1x128xf32, #tpu.memory_space<vmem>>, %arg9: memref<1x128xf32, #tpu.memory_space<vmem>>, %arg10: memref<128x128xbf16, #tpu.memory_space<vmem>>, %arg11: memref<1x128xf32, #tpu.memory_space<vmem>>, %arg12: memref<1x128xf32, #tpu.memory_space<vmem>>, %arg13: memref<1x128xf32, #tpu.memory_space<vmem>>, %arg14: memref<1x1xf32, #tpu.memory_space<vmem>>, %arg15: memref<8x1xf32, #tpu.memory_space<vmem>>) attributes {dimension_semantics = [], scalar_prefetch = 0 : i64, scratch_operands = 0 : i64, tpu.core_type = #tpu.core_type<tc>} {
    %c0 = arith.constant 0 : index
    %c0_0 = arith.constant 0 : index
    %0 = vector.load %arg0[%c0, %c0_0] : memref<8x128xf32, #tpu.memory_space<vmem>>, vector<8x128xf32>
    %c0_1 = arith.constant 0 : index
    %c0_2 = arith.constant 0 : index
    %1 = vector.load %arg1[%c0_1, %c0_2] : memref<128x128xbf16, #tpu.memory_space<vmem>>, vector<128x128xbf16>
    %c0_3 = arith.constant 0 : index
    %c0_4 = arith.constant 0 : index
    %2 = vector.load %arg2[%c0_3, %c0_4] : memref<1x128xf32, #tpu.memory_space<vmem>>, vector<1x128xf32>
    %c0_5 = arith.constant 0 : index
    %c0_6 = arith.constant 0 : index
    %3 = vector.load %arg3[%c0_5, %c0_6] : memref<1x128xf32, #tpu.memory_space<vmem>>, vector<1x128xf32>
    %4 = arith.truncf %0 : vector<8x128xf32> to vector<8x128xbf16>
    %cst = arith.constant dense<0.000000e+00> : vector<8x128xf32>
    %5 = tpu.matmul %4, %1, %cst {dimension_numbers = #tpu.dot_dimension_numbers<[1], [0], [0], [1], [0, 0, 1, 1], [], []>} : vector<8x128xbf16>, vector<128x128xbf16>, vector<8x128xf32> -> vector<8x128xf32>
    %cst_7 = arith.constant dense<0.000000e+00> : vector<128xf32>
    %6 = vector.multi_reduction <add>, %5, %cst_7 [0] : vector<8x128xf32> to vector<128xf32>
    %7 = vector.shape_cast %6 : vector<128xf32> to vector<1x128xf32>
    %cst_8 = arith.constant 8.000000e+00 : f32
    %8 = vector.broadcast %cst_8 : f32 to vector<1x128xf32>
    %9 = arith.divf %7, %8 : vector<1x128xf32>
    %10 = vector.broadcast %9 : vector<1x128xf32> to vector<8x128xf32>
    %11 = arith.subf %5, %10 : vector<8x128xf32>
    %12 = arith.mulf %11, %11 : vector<8x128xf32>
    %cst_9 = arith.constant dense<0.000000e+00> : vector<128xf32>
    %13 = vector.multi_reduction <add>, %12, %cst_9 [0] : vector<8x128xf32> to vector<128xf32>
    %14 = vector.shape_cast %13 : vector<128xf32> to vector<1x128xf32>
    %cst_10 = arith.constant 8.000000e+00 : f32
    %15 = vector.broadcast %cst_10 : f32 to vector<1x128xf32>
    %16 = arith.divf %14, %15 : vector<1x128xf32>
    %cst_11 = arith.constant 9.99999974E-6 : f32
    %17 = vector.broadcast %cst_11 : f32 to vector<1x128xf32>
    %18 = arith.addf %16, %17 : vector<1x128xf32>
    %19 = math.rsqrt %18 : vector<1x128xf32>
    %20 = arith.mulf %2, %19 : vector<1x128xf32>
    %21 = vector.broadcast %20 : vector<1x128xf32> to vector<8x128xf32>
    %22 = arith.mulf %11, %21 : vector<8x128xf32>
    %23 = vector.broadcast %3 : vector<1x128xf32> to vector<8x128xf32>
    %24 = arith.addf %22, %23 : vector<8x128xf32>
    %cst_12 = arith.constant 0.000000e+00 : f32
    %25 = vector.broadcast %cst_12 : f32 to vector<8x128xf32>
    %26 = arith.maximumf %24, %25 : vector<8x128xf32>
    %c0_13 = arith.constant 0 : index
    %c0_14 = arith.constant 0 : index
    %27 = vector.load %arg4[%c0_13, %c0_14] : memref<128x128xbf16, #tpu.memory_space<vmem>>, vector<128x128xbf16>
    %c0_15 = arith.constant 0 : index
    %c0_16 = arith.constant 0 : index
    %28 = vector.load %arg5[%c0_15, %c0_16] : memref<1x128xf32, #tpu.memory_space<vmem>>, vector<1x128xf32>
    %c0_17 = arith.constant 0 : index
    %c0_18 = arith.constant 0 : index
    %29 = vector.load %arg6[%c0_17, %c0_18] : memref<1x128xf32, #tpu.memory_space<vmem>>, vector<1x128xf32>
    %30 = arith.truncf %26 : vector<8x128xf32> to vector<8x128xbf16>
    %cst_19 = arith.constant dense<0.000000e+00> : vector<8x128xf32>
    %31 = tpu.matmul %30, %27, %cst_19 {dimension_numbers = #tpu.dot_dimension_numbers<[1], [0], [0], [1], [0, 0, 1, 1], [], []>} : vector<8x128xbf16>, vector<128x128xbf16>, vector<8x128xf32> -> vector<8x128xf32>
    %cst_20 = arith.constant dense<0.000000e+00> : vector<128xf32>
    %32 = vector.multi_reduction <add>, %31, %cst_20 [0] : vector<8x128xf32> to vector<128xf32>
    %33 = vector.shape_cast %32 : vector<128xf32> to vector<1x128xf32>
    %cst_21 = arith.constant 8.000000e+00 : f32
    %34 = vector.broadcast %cst_21 : f32 to vector<1x128xf32>
    %35 = arith.divf %33, %34 : vector<1x128xf32>
    %36 = vector.broadcast %35 : vector<1x128xf32> to vector<8x128xf32>
    %37 = arith.subf %31, %36 : vector<8x128xf32>
    %38 = arith.mulf %37, %37 : vector<8x128xf32>
    %cst_22 = arith.constant dense<0.000000e+00> : vector<128xf32>
    %39 = vector.multi_reduction <add>, %38, %cst_22 [0] : vector<8x128xf32> to vector<128xf32>
    %40 = vector.shape_cast %39 : vector<128xf32> to vector<1x128xf32>
    %cst_23 = arith.constant 8.000000e+00 : f32
    %41 = vector.broadcast %cst_23 : f32 to vector<1x128xf32>
    %42 = arith.divf %40, %41 : vector<1x128xf32>
    %cst_24 = arith.constant 9.99999974E-6 : f32
    %43 = vector.broadcast %cst_24 : f32 to vector<1x128xf32>
    %44 = arith.addf %42, %43 : vector<1x128xf32>
    %45 = math.rsqrt %44 : vector<1x128xf32>
    %46 = arith.mulf %28, %45 : vector<1x128xf32>
    %47 = vector.broadcast %46 : vector<1x128xf32> to vector<8x128xf32>
    %48 = arith.mulf %37, %47 : vector<8x128xf32>
    %49 = vector.broadcast %29 : vector<1x128xf32> to vector<8x128xf32>
    %50 = arith.addf %48, %49 : vector<8x128xf32>
    %cst_25 = arith.constant 0.000000e+00 : f32
    %51 = vector.broadcast %cst_25 : f32 to vector<8x128xf32>
    %52 = arith.maximumf %50, %51 : vector<8x128xf32>
    %c0_26 = arith.constant 0 : index
    %c0_27 = arith.constant 0 : index
    %53 = vector.load %arg7[%c0_26, %c0_27] : memref<128x128xbf16, #tpu.memory_space<vmem>>, vector<128x128xbf16>
    %c0_28 = arith.constant 0 : index
    %c0_29 = arith.constant 0 : index
    %54 = vector.load %arg8[%c0_28, %c0_29] : memref<1x128xf32, #tpu.memory_space<vmem>>, vector<1x128xf32>
    %c0_30 = arith.constant 0 : index
    %c0_31 = arith.constant 0 : index
    %55 = vector.load %arg9[%c0_30, %c0_31] : memref<1x128xf32, #tpu.memory_space<vmem>>, vector<1x128xf32>
    %56 = arith.truncf %52 : vector<8x128xf32> to vector<8x128xbf16>
    %cst_32 = arith.constant dense<0.000000e+00> : vector<8x128xf32>
    %57 = tpu.matmul %56, %53, %cst_32 {dimension_numbers = #tpu.dot_dimension_numbers<[1], [0], [0], [1], [0, 0, 1, 1], [], []>} : vector<8x128xbf16>, vector<128x128xbf16>, vector<8x128xf32> -> vector<8x128xf32>
    %cst_33 = arith.constant dense<0.000000e+00> : vector<128xf32>
    %58 = vector.multi_reduction <add>, %57, %cst_33 [0] : vector<8x128xf32> to vector<128xf32>
    %59 = vector.shape_cast %58 : vector<128xf32> to vector<1x128xf32>
    %cst_34 = arith.constant 8.000000e+00 : f32
    %60 = vector.broadcast %cst_34 : f32 to vector<1x128xf32>
    %61 = arith.divf %59, %60 : vector<1x128xf32>
    %62 = vector.broadcast %61 : vector<1x128xf32> to vector<8x128xf32>
    %63 = arith.subf %57, %62 : vector<8x128xf32>
    %64 = arith.mulf %63, %63 : vector<8x128xf32>
    %cst_35 = arith.constant dense<0.000000e+00> : vector<128xf32>
    %65 = vector.multi_reduction <add>, %64, %cst_35 [0] : vector<8x128xf32> to vector<128xf32>
    %66 = vector.shape_cast %65 : vector<128xf32> to vector<1x128xf32>
    %cst_36 = arith.constant 8.000000e+00 : f32
    %67 = vector.broadcast %cst_36 : f32 to vector<1x128xf32>
    %68 = arith.divf %66, %67 : vector<1x128xf32>
    %cst_37 = arith.constant 9.99999974E-6 : f32
    %69 = vector.broadcast %cst_37 : f32 to vector<1x128xf32>
    %70 = arith.addf %68, %69 : vector<1x128xf32>
    %71 = math.rsqrt %70 : vector<1x128xf32>
    %72 = arith.mulf %54, %71 : vector<1x128xf32>
    %73 = vector.broadcast %72 : vector<1x128xf32> to vector<8x128xf32>
    %74 = arith.mulf %63, %73 : vector<8x128xf32>
    %75 = vector.broadcast %55 : vector<1x128xf32> to vector<8x128xf32>
    %76 = arith.addf %74, %75 : vector<8x128xf32>
    %cst_38 = arith.constant 0.000000e+00 : f32
    %77 = vector.broadcast %cst_38 : f32 to vector<8x128xf32>
    %78 = arith.maximumf %76, %77 : vector<8x128xf32>
    %c0_39 = arith.constant 0 : index
    %c0_40 = arith.constant 0 : index
    %79 = vector.load %arg10[%c0_39, %c0_40] : memref<128x128xbf16, #tpu.memory_space<vmem>>, vector<128x128xbf16>
    %c0_41 = arith.constant 0 : index
    %c0_42 = arith.constant 0 : index
    %80 = vector.load %arg11[%c0_41, %c0_42] : memref<1x128xf32, #tpu.memory_space<vmem>>, vector<1x128xf32>
    %c0_43 = arith.constant 0 : index
    %c0_44 = arith.constant 0 : index
    %81 = vector.load %arg12[%c0_43, %c0_44] : memref<1x128xf32, #tpu.memory_space<vmem>>, vector<1x128xf32>
    %82 = arith.truncf %78 : vector<8x128xf32> to vector<8x128xbf16>
    %cst_45 = arith.constant dense<0.000000e+00> : vector<8x128xf32>
    %83 = tpu.matmul %82, %79, %cst_45 {dimension_numbers = #tpu.dot_dimension_numbers<[1], [0], [0], [1], [0, 0, 1, 1], [], []>} : vector<8x128xbf16>, vector<128x128xbf16>, vector<8x128xf32> -> vector<8x128xf32>
    %cst_46 = arith.constant dense<0.000000e+00> : vector<128xf32>
    %84 = vector.multi_reduction <add>, %83, %cst_46 [0] : vector<8x128xf32> to vector<128xf32>
    %85 = vector.shape_cast %84 : vector<128xf32> to vector<1x128xf32>
    %cst_47 = arith.constant 8.000000e+00 : f32
    %86 = vector.broadcast %cst_47 : f32 to vector<1x128xf32>
    %87 = arith.divf %85, %86 : vector<1x128xf32>
    %88 = vector.broadcast %87 : vector<1x128xf32> to vector<8x128xf32>
    %89 = arith.subf %83, %88 : vector<8x128xf32>
    %90 = arith.mulf %89, %89 : vector<8x128xf32>
    %cst_48 = arith.constant dense<0.000000e+00> : vector<128xf32>
    %91 = vector.multi_reduction <add>, %90, %cst_48 [0] : vector<8x128xf32> to vector<128xf32>
    %92 = vector.shape_cast %91 : vector<128xf32> to vector<1x128xf32>
    %cst_49 = arith.constant 8.000000e+00 : f32
    %93 = vector.broadcast %cst_49 : f32 to vector<1x128xf32>
    %94 = arith.divf %92, %93 : vector<1x128xf32>
    %cst_50 = arith.constant 9.99999974E-6 : f32
    %95 = vector.broadcast %cst_50 : f32 to vector<1x128xf32>
    %96 = arith.addf %94, %95 : vector<1x128xf32>
    %97 = math.rsqrt %96 : vector<1x128xf32>
    %98 = arith.mulf %80, %97 : vector<1x128xf32>
    %99 = vector.broadcast %98 : vector<1x128xf32> to vector<8x128xf32>
    %100 = arith.mulf %89, %99 : vector<8x128xf32>
    %101 = vector.broadcast %81 : vector<1x128xf32> to vector<8x128xf32>
    %102 = arith.addf %100, %101 : vector<8x128xf32>
    %cst_51 = arith.constant 0.000000e+00 : f32
    %103 = vector.broadcast %cst_51 : f32 to vector<8x128xf32>
    %104 = arith.maximumf %102, %103 : vector<8x128xf32>
    %c0_52 = arith.constant 0 : index
    %c0_53 = arith.constant 0 : index
    %105 = vector.load %arg13[%c0_52, %c0_53] : memref<1x128xf32, #tpu.memory_space<vmem>>, vector<1x128xf32>
    %c0_54 = arith.constant 0 : index
    %c0_55 = arith.constant 0 : index
    %106 = vector.load %arg14[%c0_54, %c0_55] : memref<1x1xf32, #tpu.memory_space<vmem>>, vector<1x1xf32>
    %107 = vector.broadcast %105 : vector<1x128xf32> to vector<8x128xf32>
    %108 = arith.mulf %104, %107 : vector<8x128xf32>
    %cst_56 = arith.constant dense<0.000000e+00> : vector<8xf32>
    %109 = vector.multi_reduction <add>, %108, %cst_56 [1] : vector<8x128xf32> to vector<8xf32>
    %110 = vector.shape_cast %109 : vector<8xf32> to vector<8x1xf32>
    %111 = vector.broadcast %106 : vector<1x1xf32> to vector<8x1xf32>
    %112 = arith.addf %110, %111 : vector<8x1xf32>
    %c0_57 = arith.constant 0 : index
    %c0_58 = arith.constant 0 : index
    %113 = vector.load %arg15[%c0_57, %c0_58] : memref<8x1xf32, #tpu.memory_space<vmem>>, vector<8x1xf32>
    tpu.vector_store %arg15[%c0_57, %c0_58], %112 {strides = array<i32>} : memref<8x1xf32, #tpu.memory_space<vmem>>, vector<8x1xf32>,
    return
  }
}

</mosaic_0001>

<llo_original>
// kernel: domain_classifier_forward.1
$region0: #{domain_classifier_forward.1}
  #allocation0 [shape = 'u32[]', space=smem, size = 0x4, offset = 0x4, fixed_abs, tag = 'smem constant byte address 0x4 - core index']
  #allocation1 [shape = 'u32[144,128]{1,0:T(1,128)}', space=vmem, size = 0x12000, scoped, tag = 'internal scratch']
  #allocation2 [shape = 'f32[1,1]{1,0:T(1,128)S(1)}', space=vmem, size = 0x200, scoped, tag = 'scoped memory for domain_classifier_forward.1']
  %s0 = inlined_call_operand.hbm [shape: f32[8,128], index: 0, kind: input, shape index: {}]
  %s1 = inlined_call_operand.hbm [shape: bf16[128,128], index: 1, kind: input, shape index: {}]
  %s2 = inlined_call_operand.vmem [shape: f32[1,128], index: 2, kind: input, shape index: {}]
  %s3 = inlined_call_operand.vmem [shape: f32[1,128], index: 3, kind: input, shape index: {}]
  %s4 = inlined_call_operand.hbm [shape: bf16[128,128], index: 4, kind: input, shape index: {}]
  %s5 = inlined_call_operand.vmem [shape: f32[1,128], index: 5, kind: input, shape index: {}]
  %s6 = inlined_call_operand.vmem [shape: f32[1,128], index: 6, kind: input, shape index: {}]
  %s7 = inlined_call_operand.hbm [shape: bf16[128,128], index: 7, kind: input, shape index: {}]
  %s8 = inlined_call_operand.vmem [shape: f32[1,128], index: 8, kind: input, shape index: {}]
  %s9 = inlined_call_operand.vmem [shape: f32[1,128], index: 9, kind: input, shape index: {}]
  %s10 = inlined_call_operand.hbm [shape: bf16[128,128], index: 10, kind: input, shape index: {}]
  %s11 = inlined_call_operand.vmem [shape: f32[1,128], index: 11, kind: input, shape index: {}]
  %s12 = inlined_call_operand.vmem [shape: f32[1,128], index: 12, kind: input, shape index: {}]
  %s13 = inlined_call_operand.vmem [shape: f32[1,128], index: 13, kind: input, shape index: {}]
  %s14 = inlined_call_operand.<no memory space> [shape: f32[1,1], index: 14, kind: input, shape index: {}]
  %s15 = inlined_call_operand.vmem [shape: f32[8,1], index: 15, kind: output, shape index: {}]
  %s16 = sld [smem:[#allocation0]]
  $region90: #{domain_classifier_forward.1} parent=0
    _
  %s18 = ssub.s32 1, %s16
  %s19 = scalar_select 0, %s18, %s16
  %v20 = vstv %s14
  %21 = vst [vmem:[#allocation2] sm:$0x1] %v20
  $region1: #{domain_classifier_forward.1} parent=0
    #allocation3 [shape = 'u8[4096]{0}', space=vmem, size = 0x1000, scoped, tag = 'input window, operand 0, single buffered']
    #allocation4 [shape = 's32[1]{0}', space=sflag, size = 0x4, scoped, tag = 'scoped memory for domain_classifier_forward.1']
    #allocation5 [shape = 'u8[32768]{0}', space=vmem, size = 0x8000, scoped, tag = 'input window, operand 1, single buffered']
    #allocation6 [shape = 's32[1]{0}', space=sflag, size = 0x4, scoped, tag = 'scoped memory for domain_classifier_forward.1']
    #allocation7 [shape = 'u8[32768]{0}', space=vmem, size = 0x8000, scoped, tag = 'input window, operand 4, single buffered']
    #allocation8 [shape = 'u8[32768]{0}', space=vmem, size = 0x8000, scoped, tag = 'input window, operand 7, single buffered']
    #allocation9 [shape = 's32[1]{0}', space=sflag, size = 0x4, scoped, tag = 'scoped memory for domain_classifier_forward.1']
    #allocation10 [shape = 'u8[32768]{0}', space=vmem, size = 0x8000, scoped, tag = 'input window, operand 10, single buffered']
    %22 = vsyncpa [#allocation4], 0
    %23 = vsyncpa [#allocation6], 0
    %24 = vsyncpa [#allocation9], 0
    // Predicated region
    $region2: #{domain_classifier_forward.1} parent=1 // pred_check
      _
    $region3: #{domain_classifier_forward.1} parent=1 // pred_check_branch
      %26 = sbr.rel (0) target = $region5
    $region4: #{domain_classifier_forward.1} parent=1 // pred_region
      %s28 = ssub.s32 128, 128
      %29 = vsyncadd [#allocation4], %s28
      %s31 = sshll.u32 [#allocation3], 4
      %s32 = int_to_ptr.vmem [resolvable:$true] %s31
      %34 = dma.hbm_to_vmem [thread:$0]  %s0, 128, %s32, [#allocation4]
    $region5: #{domain_classifier_forward.1} parent=1 // pred_fallthru
      _
    // Predicated region
    $region6: #{domain_classifier_forward.1} parent=1 // pred_check
      _
    $region7: #{domain_classifier_forward.1} parent=1 // pred_check_branch
      %36 = sbr.rel (0) target = $region9
    $region8: #{domain_classifier_forward.1} parent=1 // pred_region
      %s38 = ssub.s32 1024, 1024
      %39 = vsyncadd [#allocation6], %s38
      %s40 = sshll.u32 [#allocation5], 4
      %s41 = int_to_ptr.vmem [resolvable:$true] %s40
      %46 = dma.hbm_to_vmem [thread:$0]  %s1, 1024, %s41, [#allocation6], 64, 64, 4
    $region9: #{domain_classifier_forward.1} parent=1 // pred_fallthru
      _
    // Predicated region
    $region10: #{domain_classifier_forward.1} parent=1 // pred_check
      _
    $region11: #{domain_classifier_forward.1} parent=1 // pred_check_branch
      %48 = sbr.rel (0) target = $region13
    $region12: #{domain_classifier_forward.1} parent=1 // pred_region
      _
    $region13: #{domain_classifier_forward.1} parent=1 // pred_fallthru
      _
    // Predicated region
    $region14: #{domain_classifier_forward.1} parent=1 // pred_check
      _
    $region15: #{domain_classifier_forward.1} parent=1 // pred_check_branch
      %50 = sbr.rel (0) target = $region17
    $region16: #{domain_classifier_forward.1} parent=1 // pred_region
      _
    $region17: #{domain_classifier_forward.1} parent=1 // pred_fallthru
      _
    // Predicated region
    $region18: #{domain_classifier_forward.1} parent=1 // pred_check
      _
    $region19: #{domain_classifier_forward.1} parent=1 // pred_check_branch
      %52 = sbr.rel (0) target = $region21
    $region20: #{domain_classifier_forward.1} parent=1 // pred_region
      %s54 = ssub.s32 1024, 1024
      %55 = vsyncadd [#allocation6], %s54
      %s56 = sshll.u32 [#allocation7], 4
      %s57 = int_to_ptr.vmem [resolvable:$true] %s56
      %62 = dma.hbm_to_vmem [thread:$0]  %s4, 1024, %s57, [#allocation6], 64, 64, 4
    $region21: #{domain_classifier_forward.1} parent=1 // pred_fallthru
      _
    // Predicated region
    $region22: #{domain_classifier_forward.1} parent=1 // pred_check
      _
    $region23: #{domain_classifier_forward.1} parent=1 // pred_check_branch
      %64 = sbr.rel (0) target = $region25
    $region24: #{domain_classifier_forward.1} parent=1 // pred_region
      _
    $region25: #{domain_classifier_forward.1} parent=1 // pred_fallthru
      _
    // Predicated region
    $region26: #{domain_classifier_forward.1} parent=1 // pred_check
      _
    $region27: #{domain_classifier_forward.1} parent=1 // pred_check_branch
      %66 = sbr.rel (0) target = $region29
    $region28: #{domain_classifier_forward.1} parent=1 // pred_region
      _
    $region29: #{domain_classifier_forward.1} parent=1 // pred_fallthru
      _
    // Predicated region
    $region30: #{domain_classifier_forward.1} parent=1 // pred_check
      _
    $region31: #{domain_classifier_forward.1} parent=1 // pred_check_branch
      %68 = sbr.rel (0) target = $region33
    $region32: #{domain_classifier_forward.1} parent=1 // pred_region
      %s70 = ssub.s32 1024, 1024
      %71 = vsyncadd [#allocation9], %s70
      %s72 = sshll.u32 [#allocation8], 4
      %s73 = int_to_ptr.vmem [resolvable:$true] %s72
      %78 = dma.hbm_to_vmem [thread:$0]  %s7, 1024, %s73, [#allocation9], 64, 64, 4
    $region33: #{domain_classifier_forward.1} parent=1 // pred_fallthru
      _
    // Predicated region
    $region34: #{domain_classifier_forward.1} parent=1 // pred_check
      _
    $region35: #{domain_classifier_forward.1} parent=1 // pred_check_branch
      %80 = sbr.rel (0) target = $region37
    $region36: #{domain_classifier_forward.1} parent=1 // pred_region
      _
    $region37: #{domain_classifier_forward.1} parent=1 // pred_fallthru
      _
    // Predicated region
    $region38: #{domain_classifier_forward.1} parent=1 // pred_check
      _
    $region39: #{domain_classifier_forward.1} parent=1 // pred_check_branch
      %82 = sbr.rel (0) target = $region41
    $region40: #{domain_classifier_forward.1} parent=1 // pred_region
      _
    $region41: #{domain_classifier_forward.1} parent=1 // pred_fallthru
      _
    // Predicated region
    $region42: #{domain_classifier_forward.1} parent=1 // pred_check
      _
    $region43: #{domain_classifier_forward.1} parent=1 // pred_check_branch
      %84 = sbr.rel (0) target = $region45
    $region44: #{domain_classifier_forward.1} parent=1 // pred_region
      %s86 = ssub.s32 1024, 1024
      %87 = vsyncadd [#allocation9], %s86
      %s88 = sshll.u32 [#allocation10], 4
      %s89 = int_to_ptr.vmem [resolvable:$true] %s88
      %94 = dma.hbm_to_vmem [thread:$0]  %s10, 1024, %s89, [#allocation9], 64, 64, 4
    $region45: #{domain_classifier_forward.1} parent=1 // pred_fallthru
      _
    // Predicated region
    $region46: #{domain_classifier_forward.1} parent=1 // pred_check
      _
    $region47: #{domain_classifier_forward.1} parent=1 // pred_check_branch
      %96 = sbr.rel (0) target = $region49
    $region48: #{domain_classifier_forward.1} parent=1 // pred_region
      _
    $region49: #{domain_classifier_forward.1} parent=1 // pred_fallthru
      _
    // Predicated region
    $region50: #{domain_classifier_forward.1} parent=1 // pred_check
      _
    $region51: #{domain_classifier_forward.1} parent=1 // pred_check_branch
      %98 = sbr.rel (0) target = $region53
    $region52: #{domain_classifier_forward.1} parent=1 // pred_region
      _
    $region53: #{domain_classifier_forward.1} parent=1 // pred_fallthru
      _
    // Predicated region
    $region54: #{domain_classifier_forward.1} parent=1 // pred_check
      _
    $region55: #{domain_classifier_forward.1} parent=1 // pred_check_branch
      %100 = sbr.rel (0) target = $region57
    $region56: #{domain_classifier_forward.1} parent=1 // pred_region
      _
    $region57: #{domain_classifier_forward.1} parent=1 // pred_fallthru
      _
    // Predicated region
    $region58: #{domain_classifier_forward.1} parent=1 // pred_check
      _
    $region59: #{domain_classifier_forward.1} parent=1 // pred_check_branch
      %102 = sbr.rel (0) target = $region61
    $region60: #{domain_classifier_forward.1} parent=1 // pred_region
      _
    $region61: #{domain_classifier_forward.1} parent=1 // pred_fallthru
      _
    // Predicated region
    $region62: #{domain_classifier_forward.1} parent=1 // pred_check
      _
    $region63: #{domain_classifier_forward.1} parent=1 // pred_check_branch
      %104 = sbr.rel (0) target = $region65
    $region64: #{domain_classifier_forward.1} parent=1 // pred_region
      %105 = dma.done [#allocation4], 128
    $region65: #{domain_classifier_forward.1} parent=1 // pred_fallthru
      _
    // Predicated region
    $region66: #{domain_classifier_forward.1} parent=1 // pred_check
      _
    $region67: #{domain_classifier_forward.1} parent=1 // pred_check_branch
      %107 = sbr.rel (0) target = $region69
    $region68: #{domain_classifier_forward.1} parent=1 // pred_region
      %108 = dma.done [#allocation6], 1024
    $region69: #{domain_classifier_forward.1} parent=1 // pred_fallthru
      _
    // Predicated region
    $region70: #{domain_classifier_forward.1} parent=1 // pred_check
      _
    $region71: #{domain_classifier_forward.1} parent=1 // pred_check_branch
      %110 = sbr.rel (0) target = $region73
    $region72: #{domain_classifier_forward.1} parent=1 // pred_region
      %111 = dma.done [#allocation6], 1024
    $region73: #{domain_classifier_forward.1} parent=1 // pred_fallthru
      _
    // Predicated region
    $region74: #{domain_classifier_forward.1} parent=1 // pred_check
      _
    $region75: #{domain_classifier_forward.1} parent=1 // pred_check_branch
      %113 = sbr.rel (0) target = $region77
    $region76: #{domain_classifier_forward.1} parent=1 // pred_region
      %114 = dma.done [#allocation9], 1024
    $region77: #{domain_classifier_forward.1} parent=1 // pred_fallthru
      _
    // Predicated region
    $region78: #{domain_classifier_forward.1} parent=1 // pred_check
      _
    $region79: #{domain_classifier_forward.1} parent=1 // pred_check_branch
      %116 = sbr.rel (0) target = $region81
    $region80: #{domain_classifier_forward.1} parent=1 // pred_region
      %117 = dma.done [#allocation9], 1024
    $region81: #{domain_classifier_forward.1} parent=1 // pred_fallthru
      _
    %v119 = vld [vmem:[#allocation3] sm:$0xff]
    %v120 = vld [vmem:[#allocation5] sm:$0xf]
    %v121 = vld [vmem:[#allocation5 + $0x4] sm:$0xf]
    %v122 = vld [vmem:[#allocation5 + $0x8] sm:$0xf]
    %v123 = vld [vmem:[#allocation5 + $0xc] sm:$0xf]
    %v124 = vld [vmem:[#allocation5 + $0x10] sm:$0xf]
    %v125 = vld [vmem:[#allocation5 + $0x14] sm:$0xf]
    %v126 = vld [vmem:[#allocation5 + $0x18] sm:$0xf]
    %v127 = vld [vmem:[#allocation5 + $0x1c] sm:$0xf]
    %v128 = vld [vmem:[#allocation5 + $0x20] sm:$0xf]
    %v129 = vld [vmem:[#allocation5 + $0x24] sm:$0xf]
    %v130 = vld [vmem:[#allocation5 + $0x28] sm:$0xf]
    %v131 = vld [vmem:[#allocation5 + $0x2c] sm:$0xf]
    %v132 = vld [vmem:[#allocation5 + $0x30] sm:$0xf]
    %v133 = vld [vmem:[#allocation5 + $0x34] sm:$0xf]
    %v134 = vld [vmem:[#allocation5 + $0x38] sm:$0xf]
    %v135 = vld [vmem:[#allocation5 + $0x3c] sm:$0xf]
    %v136 = vld [vmem:[%s2] sm:$0x1]
    %v137 = vld [vmem:[%s3] sm:$0x1]
    %v138 = vpack.c.bf16 %v119, %v119
    %v155 = vunpack.c.l.b16 %v120
    %v156 = vunpack.c.l.b16 %v121
    %v157 = vunpack.c.l.b16 %v122
    %v158 = vunpack.c.l.b16 %v123
    %v159 = vunpack.c.l.b16 %v124
    %v160 = vunpack.c.l.b16 %v125
    %v161 = vunpack.c.l.b16 %v126
    %v162 = vunpack.c.l.b16 %v127
    %v163 = vunpack.c.l.b16 %v128
    %v164 = vunpack.c.l.b16 %v129
    %v165 = vunpack.c.l.b16 %v130
    %v166 = vunpack.c.l.b16 %v131
    %v167 = vunpack.c.l.b16 %v132
    %v168 = vunpack.c.l.b16 %v133
    %v169 = vunpack.c.l.b16 %v134
    %v170 = vunpack.c.l.b16 %v135
    %v171 = vpack.c.b16 %v156, %v155
    %v172 = vpack.c.b16 %v158, %v157
    %v173 = vpack.c.b16 %v160, %v159
    %v174 = vpack.c.b16 %v162, %v161
    %v175 = vpack.c.b16 %v164, %v163
    %v176 = vpack.c.b16 %v166, %v165
    %v177 = vpack.c.b16 %v168, %v167
    %v178 = vpack.c.b16 %v170, %v169
    %187 = vmatprep.subr.bf16.mxu0 0
    %188 = vmatpush1.bf16.msra.mxu0 %v171
    %189 = vmatprep.subr.bf16.mxu0 0
    %190 = vmatpush1.bf16.msra.mxu0 %v172
    %191 = vmatprep.subr.bf16.mxu0 0
    %192 = vmatpush1.bf16.msra.mxu0 %v173
    %193 = vmatprep.subr.bf16.mxu0 0
    %194 = vmatpush1.bf16.msra.mxu0 %v174
    %195 = vmatprep.subr.bf16.mxu0 0
    %196 = vmatpush1.bf16.msra.mxu0 %v175
    %197 = vmatprep.subr.bf16.mxu0 0
    %198 = vmatpush1.bf16.msra.mxu0 %v176
    %199 = vmatprep.subr.bf16.mxu0 0
    %200 = vmatpush1.bf16.msra.mxu0 %v177
    %201 = vmatprep.subr.bf16.mxu0 0
    %202 = vmatpush1.bf16.msra.mxu0 %v178
    %203 = vmatprep.subr.bf16.mxu0 0
    %204 = vmatpush1.bf16.msra.mxu0 0
    %205 = vmatprep.subr.bf16.mxu0 0
    %206 = vmatpush1.bf16.msra.mxu0 0
    %207 = vmatprep.subr.bf16.mxu0 0
    %208 = vmatpush1.bf16.msra.mxu0 0
    %209 = vmatprep.subr.bf16.mxu0 0
    %210 = vmatpush1.bf16.msra.mxu0 0
    %211 = vmatprep.subr.bf16.mxu0 0
    %212 = vmatpush1.bf16.msra.mxu0 0
    %213 = vmatprep.subr.bf16.mxu0 0
    %214 = vmatpush1.bf16.msra.mxu0 0
    %215 = vmatprep.subr.bf16.mxu0 0
    %216 = vmatpush1.bf16.msra.mxu0 0
    %217 = vmatprep.subr.bf16.mxu0 0
    %218 = vmatpush1.bf16.msra.mxu0 0
    %219 = vmatprep.mubr.bf16.mxu0 0
    %220 = vmatmul.mubr.bf16.gmra.mrb[0].mxu0 %v138
    %v221 = vpop.f32.mrb[0].mxu0
    %v222 = vadd.f32 0.0, %v221
    %v223 = vpop.f32.mrb[0].mxu0
    %v224 = vpop.f32.mrb[0].mxu0
    %v225 = vpop.f32.mrb[0].mxu0
    %226 = vdwg.mxu0
    %v227 = vrot.slane %v222, 4
    %v228 = vadd.f32 %v222, %v227
    %v229 = vrot.slane %v228, 2
    %v230 = vadd.f32 %v228, %v229
    %v231 = vrot.slane %v230, 1
    %v232 = vadd.f32 %v230, %v231
    %v233 = vrcp.pop 8.0
    %v234 = vmul.f32 %v232, %v233
    %v235 = vsub.f32 %v222, %v234
    %v236 = vmul.f32 %v235, %v235
    %v237 = vrot.slane %v236, 4
    %v238 = vadd.f32 %v236, %v237
    %v239 = vrot.slane %v238, 2
    %v240 = vadd.f32 %v238, %v239
    %v241 = vrot.slane %v240, 1
    %v242 = vadd.f32 %v240, %v241
    %v243 = vmul.f32 %v242, %v233
    %v244 = vadd.f32 %v243, 1e-05
    %v245 = vrsqrt.pop %v244
    %v246 = vmul.f32 %v136, %v245
    %v248 = vlaneseq
    %v249 = vshrl.u32 %v248, 7
    %v250 = vsub.s32 0, %v249
    %v251 = vrot.slane %v246, %v250
    %v253 = vmul.f32 %v235, %v251
    %v255 = vlaneseq
    %v256 = vshrl.u32 %v255, 7
    %v257 = vsub.s32 0, %v256
    %v258 = vrot.slane %v137, %v257
    %v260 = vadd.f32 %v253, %v258
    %v261 = vmax.f32 %v260, 0.0
    %v262 = vld [vmem:[#allocation7] sm:$0xf]
    %v263 = vld [vmem:[#allocation7 + $0x4] sm:$0xf]
    %v264 = vld [vmem:[#allocation7 + $0x8] sm:$0xf]
    %v265 = vld [vmem:[#allocation7 + $0xc] sm:$0xf]
    %v266 = vld [vmem:[#allocation7 + $0x10] sm:$0xf]
    %v267 = vld [vmem:[#allocation7 + $0x14] sm:$0xf]
    %v268 = vld [vmem:[#allocation7 + $0x18] sm:$0xf]
    %v269 = vld [vmem:[#allocation7 + $0x1c] sm:$0xf]
    %v270 = vld [vmem:[#allocation7 + $0x20] sm:$0xf]
    %v271 = vld [vmem:[#allocation7 + $0x24] sm:$0xf]
    %v272 = vld [vmem:[#allocation7 + $0x28] sm:$0xf]
    %v273 = vld [vmem:[#allocation7 + $0x2c] sm:$0xf]
    %v274 = vld [vmem:[#allocation7 + $0x30] sm:$0xf]
    %v275 = vld [vmem:[#allocation7 + $0x34] sm:$0xf]
    %v276 = vld [vmem:[#allocation7 + $0x38] sm:$0xf]
    %v277 = vld [vmem:[#allocation7 + $0x3c] sm:$0xf]
    %v278 = vld [vmem:[%s5] sm:$0x1]
    %v279 = vld [vmem:[%s6] sm:$0x1]
    %v280 = vpack.c.bf16 %v261, %v261
    %v297 = vunpack.c.l.b16 %v262
    %v298 = vunpack.c.l.b16 %v263
    %v299 = vunpack.c.l.b16 %v264
    %v300 = vunpack.c.l.b16 %v265
    %v301 = vunpack.c.l.b16 %v266
    %v302 = vunpack.c.l.b16 %v267
    %v303 = vunpack.c.l.b16 %v268
    %v304 = vunpack.c.l.b16 %v269
    %v305 = vunpack.c.l.b16 %v270
    %v306 = vunpack.c.l.b16 %v271
    %v307 = vunpack.c.l.b16 %v272
    %v308 = vunpack.c.l.b16 %v273
    %v309 = vunpack.c.l.b16 %v274
    %v310 = vunpack.c.l.b16 %v275
    %v311 = vunpack.c.l.b16 %v276
    %v312 = vunpack.c.l.b16 %v277
    %v313 = vpack.c.b16 %v298, %v297
    %v314 = vpack.c.b16 %v300, %v299
    %v315 = vpack.c.b16 %v302, %v301
    %v316 = vpack.c.b16 %v304, %v303
    %v317 = vpack.c.b16 %v306, %v305
    %v318 = vpack.c.b16 %v308, %v307
    %v319 = vpack.c.b16 %v310, %v309
    %v320 = vpack.c.b16 %v312, %v311
    %329 = vmatprep.subr.bf16.mxu0 0
    %330 = vmatpush1.bf16.msra.mxu0 %v313
    %331 = vmatprep.subr.bf16.mxu0 0
    %332 = vmatpush1.bf16.msra.mxu0 %v314
    %333 = vmatprep.subr.bf16.mxu0 0
    %334 = vmatpush1.bf16.msra.mxu0 %v315
    %335 = vmatprep.subr.bf16.mxu0 0
    %336 = vmatpush1.bf16.msra.mxu0 %v316
    %337 = vmatprep.subr.bf16.mxu0 0
    %338 = vmatpush1.bf16.msra.mxu0 %v317
    %339 = vmatprep.subr.bf16.mxu0 0
    %340 = vmatpush1.bf16.msra.mxu0 %v318
    %341 = vmatprep.subr.bf16.mxu0 0
    %342 = vmatpush1.bf16.msra.mxu0 %v319
    %343 = vmatprep.subr.bf16.mxu0 0
    %344 = vmatpush1.bf16.msra.mxu0 %v320
    %345 = vmatprep.subr.bf16.mxu0 0
    %346 = vmatpush1.bf16.msra.mxu0 0
    %347 = vmatprep.subr.bf16.mxu0 0
    %348 = vmatpush1.bf16.msra.mxu0 0
    %349 = vmatprep.subr.bf16.mxu0 0
    %350 = vmatpush1.bf16.msra.mxu0 0
    %351 = vmatprep.subr.bf16.mxu0 0
    %352 = vmatpush1.bf16.msra.mxu0 0
    %353 = vmatprep.subr.bf16.mxu0 0
    %354 = vmatpush1.bf16.msra.mxu0 0
    %355 = vmatprep.subr.bf16.mxu0 0
    %356 = vmatpush1.bf16.msra.mxu0 0
    %357 = vmatprep.subr.bf16.mxu0 0
    %358 = vmatpush1.bf16.msra.mxu0 0
    %359 = vmatprep.subr.bf16.mxu0 0
    %360 = vmatpush1.bf16.msra.mxu0 0
    %361 = vmatprep.mubr.bf16.mxu0 0
    %362 = vmatmul.mubr.bf16.gmra.mrb[0].mxu0 %v280
    %v363 = vpop.f32.mrb[0].mxu0
    %v364 = vadd.f32 0.0, %v363
    %v365 = vpop.f32.mrb[0].mxu0
    %v366 = vpop.f32.mrb[0].mxu0
    %v367 = vpop.f32.mrb[0].mxu0
    %368 = vdwg.mxu0
    %v369 = vrot.slane %v364, 4
    %v370 = vadd.f32 %v364, %v369
    %v371 = vrot.slane %v370, 2
    %v372 = vadd.f32 %v370, %v371
    %v373 = vrot.slane %v372, 1
    %v374 = vadd.f32 %v372, %v373
    %v375 = vmul.f32 %v374, %v233
    %v376 = vsub.f32 %v364, %v375
    %v377 = vmul.f32 %v376, %v376
    %v378 = vrot.slane %v377, 4
    %v379 = vadd.f32 %v377, %v378
    %v380 = vrot.slane %v379, 2
    %v381 = vadd.f32 %v379, %v380
    %v382 = vrot.slane %v381, 1
    %v383 = vadd.f32 %v381, %v382
    %v384 = vmul.f32 %v383, %v233
    %v385 = vadd.f32 %v384, 1e-05
    %v386 = vrsqrt.pop %v385
    %v387 = vmul.f32 %v278, %v386
    %v389 = vlaneseq
    %v390 = vshrl.u32 %v389, 7
    %v391 = vsub.s32 0, %v390
    %v392 = vrot.slane %v387, %v391
    %v394 = vmul.f32 %v376, %v392
    %v396 = vlaneseq
    %v397 = vshrl.u32 %v396, 7
    %v398 = vsub.s32 0, %v397
    %v399 = vrot.slane %v279, %v398
    %v401 = vadd.f32 %v394, %v399
    %v402 = vmax.f32 %v401, 0.0
    %v403 = vld [vmem:[#allocation8] sm:$0xf]
    %v404 = vld [vmem:[#allocation8 + $0x4] sm:$0xf]
    %v405 = vld [vmem:[#allocation8 + $0x8] sm:$0xf]
    %v406 = vld [vmem:[#allocation8 + $0xc] sm:$0xf]
    %v407 = vld [vmem:[#allocation8 + $0x10] sm:$0xf]
    %v408 = vld [vmem:[#allocation8 + $0x14] sm:$0xf]
    %v409 = vld [vmem:[#allocation8 + $0x18] sm:$0xf]
    %v410 = vld [vmem:[#allocation8 + $0x1c] sm:$0xf]
    %v411 = vld [vmem:[#allocation8 + $0x20] sm:$0xf]
    %v412 = vld [vmem:[#allocation8 + $0x24] sm:$0xf]
    %v413 = vld [vmem:[#allocation8 + $0x28] sm:$0xf]
    %v414 = vld [vmem:[#allocation8 + $0x2c] sm:$0xf]
    %v415 = vld [vmem:[#allocation8 + $0x30] sm:$0xf]
    %v416 = vld [vmem:[#allocation8 + $0x34] sm:$0xf]
    %v417 = vld [vmem:[#allocation8 + $0x38] sm:$0xf]
    %v418 = vld [vmem:[#allocation8 + $0x3c] sm:$0xf]
    %v419 = vld [vmem:[%s8] sm:$0x1]
    %v420 = vld [vmem:[%s9] sm:$0x1]
    %v421 = vpack.c.bf16 %v402, %v402
    %v438 = vunpack.c.l.b16 %v403
    %v439 = vunpack.c.l.b16 %v404
    %v440 = vunpack.c.l.b16 %v405
    %v441 = vunpack.c.l.b16 %v406
    %v442 = vunpack.c.l.b16 %v407
    %v443 = vunpack.c.l.b16 %v408
    %v444 = vunpack.c.l.b16 %v409
    %v445 = vunpack.c.l.b16 %v410
    %v446 = vunpack.c.l.b16 %v411
    %v447 = vunpack.c.l.b16 %v412
    %v448 = vunpack.c.l.b16 %v413
    %v449 = vunpack.c.l.b16 %v414
    %v450 = vunpack.c.l.b16 %v415
    %v451 = vunpack.c.l.b16 %v416
    %v452 = vunpack.c.l.b16 %v417
    %v453 = vunpack.c.l.b16 %v418
    %v454 = vpack.c.b16 %v439, %v438
    %v455 = vpack.c.b16 %v441, %v440
    %v456 = vpack.c.b16 %v443, %v442
    %v457 = vpack.c.b16 %v445, %v444
    %v458 = vpack.c.b16 %v447, %v446
    %v459 = vpack.c.b16 %v449, %v448
    %v460 = vpack.c.b16 %v451, %v450
    %v461 = vpack.c.b16 %v453, %v452
    %470 = vmatprep.subr.bf16.mxu0 0
    %471 = vmatpush1.bf16.msra.mxu0 %v454
    %472 = vmatprep.subr.bf16.mxu0 0
    %473 = vmatpush1.bf16.msra.mxu0 %v455
    %474 = vmatprep.subr.bf16.mxu0 0
    %475 = vmatpush1.bf16.msra.mxu0 %v456
    %476 = vmatprep.subr.bf16.mxu0 0
    %477 = vmatpush1.bf16.msra.mxu0 %v457
    %478 = vmatprep.subr.bf16.mxu0 0
    %479 = vmatpush1.bf16.msra.mxu0 %v458
    %480 = vmatprep.subr.bf16.mxu0 0
    %481 = vmatpush1.bf16.msra.mxu0 %v459
    %482 = vmatprep.subr.bf16.mxu0 0
    %483 = vmatpush1.bf16.msra.mxu0 %v460
    %484 = vmatprep.subr.bf16.mxu0 0
    %485 = vmatpush1.bf16.msra.mxu0 %v461
    %486 = vmatprep.subr.bf16.mxu0 0
    %487 = vmatpush1.bf16.msra.mxu0 0
    %488 = vmatprep.subr.bf16.mxu0 0
    %489 = vmatpush1.bf16.msra.mxu0 0
    %490 = vmatprep.subr.bf16.mxu0 0
    %491 = vmatpush1.bf16.msra.mxu0 0
    %492 = vmatprep.subr.bf16.mxu0 0
    %493 = vmatpush1.bf16.msra.mxu0 0
    %494 = vmatprep.subr.bf16.mxu0 0
    %495 = vmatpush1.bf16.msra.mxu0 0
    %496 = vmatprep.subr.bf16.mxu0 0
    %497 = vmatpush1.bf16.msra.mxu0 0
    %498 = vmatprep.subr.bf16.mxu0 0
    %499 = vmatpush1.bf16.msra.mxu0 0
    %500 = vmatprep.subr.bf16.mxu0 0
    %501 = vmatpush1.bf16.msra.mxu0 0
    %502 = vmatprep.mubr.bf16.mxu0 0
    %503 = vmatmul.mubr.bf16.gmra.mrb[0].mxu0 %v421
    %v504 = vpop.f32.mrb[0].mxu0
    %v505 = vadd.f32 0.0, %v504
    %v506 = vpop.f32.mrb[0].mxu0
    %v507 = vpop.f32.mrb[0].mxu0
    %v508 = vpop.f32.mrb[0].mxu0
    %509 = vdwg.mxu0
    %v510 = vrot.slane %v505, 4
    %v511 = vadd.f32 %v505, %v510
    %v512 = vrot.slane %v511, 2
    %v513 = vadd.f32 %v511, %v512
    %v514 = vrot.slane %v513, 1
    %v515 = vadd.f32 %v513, %v514
    %v516 = vmul.f32 %v515, %v233
    %v517 = vsub.f32 %v505, %v516
    %v518 = vmul.f32 %v517, %v517
    %v519 = vrot.slane %v518, 4
    %v520 = vadd.f32 %v518, %v519
    %v521 = vrot.slane %v520, 2
    %v522 = vadd.f32 %v520, %v521
    %v523 = vrot.slane %v522, 1
    %v524 = vadd.f32 %v522, %v523
    %v525 = vmul.f32 %v524, %v233
    %v526 = vadd.f32 %v525, 1e-05
    %v527 = vrsqrt.pop %v526
    %v528 = vmul.f32 %v419, %v527
    %v530 = vlaneseq
    %v531 = vshrl.u32 %v530, 7
    %v532 = vsub.s32 0, %v531
    %v533 = vrot.slane %v528, %v532
    %v535 = vmul.f32 %v517, %v533
    %v537 = vlaneseq
    %v538 = vshrl.u32 %v537, 7
    %v539 = vsub.s32 0, %v538
    %v540 = vrot.slane %v420, %v539
    %v542 = vadd.f32 %v535, %v540
    %v543 = vmax.f32 %v542, 0.0
    %v544 = vld [vmem:[#allocation10] sm:$0xf]
    %v545 = vld [vmem:[#allocation10 + $0x4] sm:$0xf]
    %v546 = vld [vmem:[#allocation10 + $0x8] sm:$0xf]
    %v547 = vld [vmem:[#allocation10 + $0xc] sm:$0xf]
    %v548 = vld [vmem:[#allocation10 + $0x10] sm:$0xf]
    %v549 = vld [vmem:[#allocation10 + $0x14] sm:$0xf]
    %v550 = vld [vmem:[#allocation10 + $0x18] sm:$0xf]
    %v551 = vld [vmem:[#allocation10 + $0x1c] sm:$0xf]
    %v552 = vld [vmem:[#allocation10 + $0x20] sm:$0xf]
    %v553 = vld [vmem:[#allocation10 + $0x24] sm:$0xf]
    %v554 = vld [vmem:[#allocation10 + $0x28] sm:$0xf]
    %v555 = vld [vmem:[#allocation10 + $0x2c] sm:$0xf]
    %v556 = vld [vmem:[#allocation10 + $0x30] sm:$0xf]
    %v557 = vld [vmem:[#allocation10 + $0x34] sm:$0xf]
    %v558 = vld [vmem:[#allocation10 + $0x38] sm:$0xf]
    %v559 = vld [vmem:[#allocation10 + $0x3c] sm:$0xf]
    %v560 = vld [vmem:[%s11] sm:$0x1]
    %v561 = vld [vmem:[%s12] sm:$0x1]
    %v562 = vpack.c.bf16 %v543, %v543
    %v579 = vunpack.c.l.b16 %v544
    %v580 = vunpack.c.l.b16 %v545
    %v581 = vunpack.c.l.b16 %v546
    %v582 = vunpack.c.l.b16 %v547
    %v583 = vunpack.c.l.b16 %v548
    %v584 = vunpack.c.l.b16 %v549
    %v585 = vunpack.c.l.b16 %v550
    %v586 = vunpack.c.l.b16 %v551
    %v587 = vunpack.c.l.b16 %v552
    %v588 = vunpack.c.l.b16 %v553
    %v589 = vunpack.c.l.b16 %v554
    %v590 = vunpack.c.l.b16 %v555
    %v591 = vunpack.c.l.b16 %v556
    %v592 = vunpack.c.l.b16 %v557
    %v593 = vunpack.c.l.b16 %v558
    %v594 = vunpack.c.l.b16 %v559
    %v595 = vpack.c.b16 %v580, %v579
    %v596 = vpack.c.b16 %v582, %v581
    %v597 = vpack.c.b16 %v584, %v583
    %v598 = vpack.c.b16 %v586, %v585
    %v599 = vpack.c.b16 %v588, %v587
    %v600 = vpack.c.b16 %v590, %v589
    %v601 = vpack.c.b16 %v592, %v591
    %v602 = vpack.c.b16 %v594, %v593
    %611 = vmatprep.subr.bf16.mxu0 0
    %612 = vmatpush1.bf16.msra.mxu0 %v595
    %613 = vmatprep.subr.bf16.mxu0 0
    %614 = vmatpush1.bf16.msra.mxu0 %v596
    %615 = vmatprep.subr.bf16.mxu0 0
    %616 = vmatpush1.bf16.msra.mxu0 %v597
    %617 = vmatprep.subr.bf16.mxu0 0
    %618 = vmatpush1.bf16.msra.mxu0 %v598
    %619 = vmatprep.subr.bf16.mxu0 0
    %620 = vmatpush1.bf16.msra.mxu0 %v599
    %621 = vmatprep.subr.bf16.mxu0 0
    %622 = vmatpush1.bf16.msra.mxu0 %v600
    %623 = vmatprep.subr.bf16.mxu0 0
    %624 = vmatpush1.bf16.msra.mxu0 %v601
    %625 = vmatprep.subr.bf16.mxu0 0
    %626 = vmatpush1.bf16.msra.mxu0 %v602
    %627 = vmatprep.subr.bf16.mxu0 0
    %628 = vmatpush1.bf16.msra.mxu0 0
    %629 = vmatprep.subr.bf16.mxu0 0
    %630 = vmatpush1.bf16.msra.mxu0 0
    %631 = vmatprep.subr.bf16.mxu0 0
    %632 = vmatpush1.bf16.msra.mxu0 0
    %633 = vmatprep.subr.bf16.mxu0 0
    %634 = vmatpush1.bf16.msra.mxu0 0
    %635 = vmatprep.subr.bf16.mxu0 0
    %636 = vmatpush1.bf16.msra.mxu0 0
    %637 = vmatprep.subr.bf16.mxu0 0
    %638 = vmatpush1.bf16.msra.mxu0 0
    %639 = vmatprep.subr.bf16.mxu0 0
    %640 = vmatpush1.bf16.msra.mxu0 0
    %641 = vmatprep.subr.bf16.mxu0 0
    %642 = vmatpush1.bf16.msra.mxu0 0
    %643 = vmatprep.mubr.bf16.mxu0 0
    %644 = vmatmul.mubr.bf16.gmra.mrb[0].mxu0 %v562
    %v645 = vpop.f32.mrb[0].mxu0
    %v646 = vadd.f32 0.0, %v645
    %v647 = vpop.f32.mrb[0].mxu0
    %v648 = vpop.f32.mrb[0].mxu0
    %v649 = vpop.f32.mrb[0].mxu0
    %650 = vdwg.mxu0
    %v651 = vrot.slane %v646, 4
    %v652 = vadd.f32 %v646, %v651
    %v653 = vrot.slane %v652, 2
    %v654 = vadd.f32 %v652, %v653
    %v655 = vrot.slane %v654, 1
    %v656 = vadd.f32 %v654, %v655
    %v657 = vmul.f32 %v656, %v233
    %v658 = vsub.f32 %v646, %v657
    %v659 = vmul.f32 %v658, %v658
    %v660 = vrot.slane %v659, 4
    %v661 = vadd.f32 %v659, %v660
    %v662 = vrot.slane %v661, 2
    %v663 = vadd.f32 %v661, %v662
    %v664 = vrot.slane %v663, 1
    %v665 = vadd.f32 %v663, %v664
    %v666 = vmul.f32 %v665, %v233
    %v667 = vadd.f32 %v666, 1e-05
    %v668 = vrsqrt.pop %v667
    %v669 = vmul.f32 %v560, %v668
    %v671 = vlaneseq
    %v672 = vshrl.u32 %v671, 7
    %v673 = vsub.s32 0, %v672
    %v674 = vrot.slane %v669, %v673
    %v676 = vmul.f32 %v658, %v674
    %v678 = vlaneseq
    %v679 = vshrl.u32 %v678, 7
    %v680 = vsub.s32 0, %v679
    %v681 = vrot.slane %v561, %v680
    %v683 = vadd.f32 %v676, %v681
    %v684 = vmax.f32 %v683, 0.0
    %v685 = vld [vmem:[%s13] sm:$0x1]
    %v686 = vld [vmem:[#allocation2] sm:$0x1]
    %v688 = vlaneseq
    %v689 = vshrl.u32 %v688, 7
    %v690 = vsub.s32 0, %v689
    %v691 = vrot.slane %v685, %v690
    %v693 = vmul.f32 %v684, %v691
    %694 = vadd.xlane.f32.xlu0 %v693
    %v695 = vpop.xlane.xlu0 %694
    %v697 = vlaneseq
    %v698 = vshrl.u32 %v697, 7
    %v699 = vsub.s32 0, %v698
    %v700 = vrot.slane %v686, %v699
    %v702 = vadd.f32 %v695, %v700
    %vm703 = vcmask 7168
    %704 = vst.msk [vmem:[%s15] sm:$0xff] %vm703, %v702
    // Predicated region
    $region82: #{domain_classifier_forward.1} parent=1 // pred_check
      _
    $region83: #{domain_classifier_forward.1} parent=1 // pred_check_branch
      %706 = sbr.rel (0) target = $region85
    $region84: #{domain_classifier_forward.1} parent=1 // pred_region
      _
    $region85: #{domain_classifier_forward.1} parent=1 // pred_fallthru
      _
    // Predicated region
    $region86: #{domain_classifier_forward.1} parent=1 // pred_check
      _
    $region87: #{domain_classifier_forward.1} parent=1 // pred_check_branch
      %708 = sbr.rel (0) target = $region89
    $region88: #{domain_classifier_forward.1} parent=1 // pred_region
      _
    $region89: #{domain_classifier_forward.1} parent=1 // pred_fallthru
      _
    %709 = vsyncpa [#allocation4], 1
    %710 = vsyncpa [#allocation6], 1
    %711 = vsyncpa [#allocation9], 1

</llo_original>
